<compile_context>
chip_gen: v5e
topology: v5e:2x2
jax: 0.10.0
libtpu: 0.0.40
codegen_flags: <defaults>
</compile_context>

<pallas_src>
import jax
import jax.numpy as jnp
from jax import lax
from jax.experimental import pallas as pl
from jax.experimental.pallas import tpu as pltpu


def _round_up(x, m):
    return ((x + m - 1) // m) * m


# ----------------------------- Pallas kernel --------------------------------

def _make_fused_kernel(H, W, Cf):
    """Kernel for one image: build 2x2-shift patches in VMEM, one fused matmul."""
    Wp2 = W + 2
    Mimg = (H + 1) * Wp2          # generalized pixels (incl. one garbage column/row phase)
    Lfill = Mimg - 1              # == (H+2)*(W+2) - (W+3): largest in-range slice length
    shifts = (0, 1, Wp2, Wp2 + 1)  # flat offset of patch tap (a,b): a*(W+2)+b

    def kernel(w_ref, b_ref, x_ref, o_ref, p_ref):
        # w_ref: (Cout*4, Kpad)  fused weight (tiny, constant block)
        # b_ref: (Cout*4, 1)     conv bias, broadcast across lanes
        # x_ref: (1, Cf, (H+2)*(W+2)) one padded+augmented image, row-major flat
        # o_ref: (1, Cout*4, Mpad)     output, generalized pixels on the lane dim
        # p_ref: (Kpad, Mpad)          scratch patch matrix (VMEM)
        p_ref[...] = jnp.zeros_like(p_ref)        # also zeroes the K-padding rows / tail
        xflat = x_ref[0]                          # (Cf, (H+2)*(W+2))
        for idx, d in enumerate(shifts):          # static 4-iteration unroll
            p_ref[idx * Cf:(idx + 1) * Cf, :Lfill] = xflat[:, d:d + Lfill]
        acc = jnp.dot(w_ref[...], p_ref[...], preferred_element_type=jnp.float32)
        o_ref[0] = (acc + b_ref[...]).astype(o_ref.dtype)

    return kernel


def _fused_subpixel_conv(w_mat, b_vec, xflat, Cf, Pflat, Mpad, H, W):
    N = xflat.shape[0]
    Nout, Kpad = w_mat.shape
    # per-step VMEM footprint (double-buffered in/out + scratch), with headroom
    vmem_need = 4 * (2 * Cf * Pflat + 2 * Nout * Mpad + Kpad * Mpad
                     + Nout * Kpad + Nout) + (1 << 20)
    return pl.pallas_call(
        _make_fused_kernel(H, W, Cf),
        out_shape=jax.ShapeDtypeStruct((N, Nout, Mpad), jnp.float32),
        grid_spec=pltpu.PrefetchScalarGridSpec(
            num_scalar_prefetch=0,
            grid=(N,),
            in_specs=[
                pl.BlockSpec((Nout, Kpad), lambda n: (0, 0)),
                pl.BlockSpec((Nout, 1), lambda n: (0, 0)),
                pl.BlockSpec((1, Cf, Pflat), lambda n: (n, 0, 0)),
            ],
            out_specs=pl.BlockSpec((1, Nout, Mpad), lambda n: (n, 0, 0)),
            scratch_shapes=[pltpu.VMEM((Kpad, Mpad), jnp.float32)],
        ),
        compiler_params=pltpu.CompilerParams(
            dimension_semantics=("parallel",),
            vmem_limit_bytes=int(min(max(vmem_need, 32 << 20), 48 << 20)),
        ),
    )(w_mat, b_vec, xflat)


# ------------------------- fused weight construction -------------------------

def _build_fused_weight(wt, bt, wc):
    """Precompose ConvTranspose2d(k=2,s=2) (+its bias) with Conv2d(k=3,p=1).

    Returns W of shape (Cout*4, 4*(Cin+1)) such that
      out[n, o, 2g-1+i, 2s-1+j] = bc[o] +
        sum_{a,b in {0,1}} sum_{c'} W[o*4+i*2+j, (2a+b)*(Cin+1)+c'] * xp[n, c', g+a, s+b]
    where xp is the zero-padded augmented input and channel c'=Cin is the constant-1
    validity channel (zero in the pad ring), reproducing the transposed-conv bias
    exactly, including at the 3x3 conv's zero-padded border.
    """
    Cin, Cmid, Kt, _ = wt.shape
    Cout, _, Kc, _ = wc.shape
    Cf = Cin + 1
    wt_aug = jnp.concatenate(
        [wt.astype(jnp.float32),
         jnp.broadcast_to(bt.astype(jnp.float32)[None, :, None, None],
                          (1, Cmid, Kt, Kt))],
        axis=0)                                               # (Cf, Cmid, 2, 2)
    blocks = []
    for a in range(2):
        for b in range(2):
            acc = jnp.zeros((Cf, Cout, 2, 2), jnp.float32)
            for i in range(2):
                for j in range(2):
                    s = jnp.zeros((Cf, Cout), jnp.float32)
                    for p in range(Kt):
                        ki = 2 * a + p - i
                        if not (0 <= ki < Kc):
                            continue
                        for q in range(Kt):
                            kj = 2 * b + q - j
                            if not (0 <= kj < Kc):
                                continue
                            s = s + jnp.einsum(
                                "cd,od->co", wt_aug[:, :, p, q], wc[:, :, ki, kj])
                    acc = acc.at[:, :, i, j].set(s)
            blocks.append(acc)
    wf = jnp.stack(blocks, axis=0)                            # (4=2a+b, Cf, Cout, 2, 2)
    return jnp.transpose(wf, (2, 3, 4, 0, 1)).reshape(Cout * 4, 4 * Cf)


# ------------------------- ResizeConv2d forward ------------------------------

def resize_conv2d_forward(x, params):
    """x: (N, Cin, H, W) float32, NCHW.  Returns (N, Cout, 2H, 2W)."""
    wt, bt = params["dconv_w"], params["dconv_b"]   # (Cin, Cin, 2, 2), (Cin,)
    wc, bc = params["conv_w"], params["conv_b"]     # (Cout, Cin, 3, 3), (Cout,)

    N, Cin, H, W = x.shape
    Kt = wt.shape[2]
    Cout, _, Kc, _ = wc.shape
    assert Kt == 2 and Kc == 3, "fusion assumes ConvTranspose2d(k=2,s=2)+Conv2d(k=3,p=1)"

    Cf = Cin + 1                     # + validity/ones channel (carries dconv bias)
    Kin = 4 * Cf
    Kpad = _round_up(Kin, 8)         # explicit sublane padding of the contraction dim
    Nout = Cout * 4
    Wp2 = W + 2
    Pflat = (H + 2) * Wp2            # flattened padded image length
    Mimg = (H + 1) * Wp2             # generalized pixels computed by the kernel
    Mpad = _round_up(Mimg, 128)      # lane-dense output width

    w_mat = _build_fused_weight(wt, bt, wc)                   # (Cout*4, 4*Cf)
    w_mat = jnp.pad(w_mat, ((0, 0), (0, Kpad - Kin)))         # zero K-padding columns
    b_vec = jnp.repeat(bc.astype(jnp.float32), 4).reshape(Nout, 1)

    # Only wrapper-side materialization: padded + ones-augmented input (~1.26x input).
    x_aug = jnp.concatenate(
        [x.astype(jnp.float32), jnp.ones((N, 1, H, W), jnp.float32)], axis=1)
    xp = jnp.pad(x_aug, ((0, 0), (0, 0), (1, 1), (1, 1)))     # (N, Cf, H+2, W+2)
    xflat = xp.reshape(N, Cf, Pflat)                          # contiguous merge: free

    out_k = _fused_subpixel_conv(w_mat, b_vec, xflat, Cf, Pflat, Mpad, H, W)

    # Depth-to-space of the 4 output phases.  Crop the lane padding first so the
    # transpose touches only real data; then drop the out-of-range border / garbage
    # column coming from the flat-stride trick.
    out = out_k[:, :, :Mimg].reshape(N, Cout, 2, 2, H + 1, Wp2)   # (n, o, i, j, g, s)
    out = jnp.transpose(out, (0, 1, 4, 2, 5, 3))                  # (n, o, g, i, s, j)
    out = out.reshape(N, Cout, 2 * (H + 1), 2 * Wp2)
    return out[:, :, 1:2 * H + 1, 1:2 * W + 1]


# ------------------------------ reference ------------------------------------

def resize_conv2d_reference(x, params):
    wt, bt = params["dconv_w"], params["dconv_b"]
    wc, bc = params["conv_w"], params["conv_b"]
    N, Cin, H, W = x.shape
    Cmid, Kt = wt.shape[1], wt.shape[2]
    # ConvTranspose2d(k=2, s=2): each input pixel writes a disjoint 2x2 output block.
    up = jnp.einsum("nchw,cdij->ndhiwj", x, wt).reshape(N, Cmid, H * Kt, W * Kt)
    up = up + bt[None, :, None, None]
    ref = lax.conv_general_dilated(
        up, wc, window_strides=(1, 1), padding=((1, 1), (1, 1)),
        dimension_numbers=("NCHW", "OIHW", "NCHW"),
    ) + bc[None, :, None, None]
    return ref


# --------------------------------- main ---------------------------------------

if __name__ == "__main__":
    # ResizeConv2d(in_channels=4, out_channels=8, kernel_size=3, scale_factor=2)
    in_channels, out_channels, kernel_size = 4, 8, 3
    N, H, W = 2, 16, 16

    key = jax.random.PRNGKey(0)
    k1, k2, k3, k4, k5 = jax.random.split(key, 5)

    params = {
        # ConvTranspose2d(in, in, kernel_size=2, stride=2): weight (in, out=in, 2, 2)
        "dconv_w": 0.1 * jax.random.normal(k1, (in_channels, in_channels, 2, 2), jnp.float32),
        "dconv_b": 0.1 * jax.random.normal(k2, (in_channels,), jnp.float32),
        # Conv2d(in, out, kernel_size, stride=1, padding=1): weight (out, in, k, k)
        "conv_w": 0.1 * jax.random.normal(k3, (out_channels, in_channels, kernel_size, kernel_size), jnp.float32),
        "conv_b": 0.1 * jax.random.normal(k4, (out_channels,), jnp.float32),
    }

    x = jax.random.normal(k5, (N, in_channels, H, W), jnp.float32)

    fwd = jax.jit(resize_conv2d_forward)
    out = jax.block_until_ready(fwd(x, params))
    ref = jax.block_until_ready(resize_conv2d_reference(x, params))

    assert out.shape == (N, out_channels, 2 * H, 2 * W), out.shape
    assert jnp.allclose(out, ref, rtol=1e-4, atol=1e-4), float(jnp.max(jnp.abs(out - ref)))

    print("KERNEL_OK")
</pallas_src>

<mosaic_0001>
module attributes {stable_mosaic.version = 11 : i64} {
  func.func @kernel(%arg0: i32, %arg1: memref<32x24xf32, #tpu.memory_space<vmem>>, %arg2: memref<32x1xf32, #tpu.memory_space<vmem>>, %arg3: memref<1x5x324xf32, #tpu.memory_space<vmem>>, %arg4: memref<1x32x384xf32, #tpu.memory_space<vmem>>, %arg5: memref<24x384xf32, #tpu.memory_space<vmem>>) attributes {dimension_semantics = [#tpu.dimension_semantics<parallel>], iteration_bounds = array<i64: 2>, scalar_prefetch = 0 : i64, scratch_operands = 1 : i64, tpu.core_type = #tpu.core_type<tc>, window_params = [{pipeline_mode = #tpu.pipeline_mode<synchronous>, transform_indices = @transform_0, window_bounds = array<i64: 32, 24>}, {pipeline_mode = #tpu.pipeline_mode<synchronous>, transform_indices = @transform_1, window_bounds = array<i64: 32, 1>}, {transform_indices = @transform_2, window_bounds = array<i64: 1, 5, 324>}, {transform_indices = @transform_3, window_bounds = array<i64: 1, 32, 384>}]} {
    %cst = arith.constant 0.000000e+00 : f32
    %0 = vector.broadcast %cst : f32 to vector<24x384xf32>
    %c0 = arith.constant 0 : index
    %c0_0 = arith.constant 0 : index
    %1 = vector.load %arg5[%c0, %c0_0] : memref<24x384xf32, #tpu.memory_space<vmem>>, vector<24x384xf32>
    tpu.vector_store %arg5[%c0, %c0_0], %0 {strides = array<i32>} : memref<24x384xf32, #tpu.memory_space<vmem>>, vector<24x384xf32>,
    %c0_1 = arith.constant 0 : index
    %c0_2 = arith.constant 0 : index
    %c0_3 = arith.constant 0 : index
    %2 = vector.load %arg3[%c0_1, %c0_2, %c0_3] : memref<1x5x324xf32, #tpu.memory_space<vmem>>, vector<1x5x324xf32>
    %3 = vector.shape_cast %2 : vector<1x5x324xf32> to vector<5x324xf32>
    %4 = vector.extract_strided_slice %3 {offsets = [0, 0], sizes = [5, 305], strides = [1, 1]} : vector<5x324xf32> to vector<5x305xf32>
    %c0_4 = arith.constant 0 : index
    %c0_5 = arith.constant 0 : index
    %5 = vector.load %arg5[%c0_4, %c0_5] : memref<24x384xf32, #tpu.memory_space<vmem>>, vector<5x305xf32>
    tpu.vector_store %arg5[%c0_4, %c0_5], %4 {strides = array<i32>} : memref<24x384xf32, #tpu.memory_space<vmem>>, vector<5x305xf32>,
    %6 = vector.extract_strided_slice %3 {offsets = [0, 1], sizes = [5, 305], strides = [1, 1]} : vector<5x324xf32> to vector<5x305xf32>
    %c5 = arith.constant 5 : index
    %c0_6 = arith.constant 0 : index
    %7 = vector.load %arg5[%c5, %c0_6] : memref<24x384xf32, #tpu.memory_space<vmem>>, vector<5x305xf32>
    tpu.vector_store %arg5[%c5, %c0_6], %6 {strides = array<i32>} : memref<24x384xf32, #tpu.memory_space<vmem>>, vector<5x305xf32>,
    %8 = vector.extract_strided_slice %3 {offsets = [0, 18], sizes = [5, 305], strides = [1, 1]} : vector<5x324xf32> to vector<5x305xf32>
    %c10 = arith.constant 10 : index
    %c0_7 = arith.constant 0 : index
    %9 = vector.load %arg5[%c10, %c0_7] : memref<24x384xf32, #tpu.memory_space<vmem>>, vector<5x305xf32>
    tpu.vector_store %arg5[%c10, %c0_7], %8 {strides = array<i32>} : memref<24x384xf32, #tpu.memory_space<vmem>>, vector<5x305xf32>,
    %10 = vector.extract_strided_slice %3 {offsets = [0, 19], sizes = [5, 305], strides = [1, 1]} : vector<5x324xf32> to vector<5x305xf32>
    %c15 = arith.constant 15 : index
    %c0_8 = arith.constant 0 : index
    %11 = vector.load %arg5[%c15, %c0_8] : memref<24x384xf32, #tpu.memory_space<vmem>>, vector<5x305xf32>
    tpu.vector_store %arg5[%c15, %c0_8], %10 {strides = array<i32>} : memref<24x384xf32, #tpu.memory_space<vmem>>, vector<5x305xf32>,
    %c0_9 = arith.constant 0 : index
    %c0_10 = arith.constant 0 : index
    %12 = vector.load %arg1[%c0_9, %c0_10] : memref<32x24xf32, #tpu.memory_space<vmem>>, vector<32x24xf32>
    %c0_11 = arith.constant 0 : index
    %c0_12 = arith.constant 0 : index
    %13 = vector.load %arg5[%c0_11, %c0_12] : memref<24x384xf32, #tpu.memory_space<vmem>>, vector<24x384xf32>
    %cst_13 = arith.constant dense<0.000000e+00> : vector<32x384xf32>
    %14 = tpu.matmul %12, %13, %cst_13 {dimension_numbers = #tpu.dot_dimension_numbers<[1], [0], [0], [1], [0, 0, 1, 1], [], []>} : vector<32x24xf32>, vector<24x384xf32>, vector<32x384xf32> -> vector<32x384xf32>
    %c0_14 = arith.constant 0 : index
    %c0_15 = arith.constant 0 : index
    %15 = vector.load %arg2[%c0_14, %c0_15] : memref<32x1xf32, #tpu.memory_space<vmem>>, vector<32x1xf32>
    %16 = vector.broadcast %15 : vector<32x1xf32> to vector<32x384xf32>
    %17 = arith.addf %14, %16 : vector<32x384xf32>
    %c0_16 = arith.constant 0 : index
    %c0_17 = arith.constant 0 : index
    %c0_18 = arith.constant 0 : index
    %18 = vector.load %arg4[%c0_16, %c0_17, %c0_18] : memref<1x32x384xf32, #tpu.memory_space<vmem>>, vector<1x32x384xf32>
    %19 = vector.shape_cast %18 : vector<1x32x384xf32> to vector<32x384xf32>
    %20 = vector.shape_cast %17 : vector<32x384xf32> to vector<1x32x384xf32>
    tpu.vector_store %arg4[%c0_16, %c0_17, %c0_18], %20 {strides = array<i32>} : memref<1x32x384xf32, #tpu.memory_space<vmem>>, vector<1x32x384xf32>,
    return
  }
  func.func @transform_0(%arg0: i32) -> (i32, i32) {
    %c0_i32 = arith.constant 0 : i32
    %c0_i32_0 = arith.constant 0 : i32
    %c0_i32_1 = arith.constant 0 : i32
    return %c0_i32, %c0_i32_0 : i32, i32
  }
  func.func @transform_1(%arg0: i32) -> (i32, i32) {
    %c0_i32 = arith.constant 0 : i32
    %c0_i32_0 = arith.constant 0 : i32
    %c0_i32_1 = arith.constant 0 : i32
    return %c0_i32, %c0_i32_0 : i32, i32
  }
  func.func @transform_2(%arg0: i32) -> (i32, i32, i32) {
    %c0_i32 = arith.constant 0 : i32
    %c0_i32_0 = arith.constant 0 : i32
    %c0_i32_1 = arith.constant 0 : i32
    return %arg0, %c0_i32, %c0_i32_0 : i32, i32, i32
  }
  func.func @transform_3(%arg0: i32) -> (i32, i32, i32) {
    %c0_i32 = arith.constant 0 : i32
    %c0_i32_0 = arith.constant 0 : i32
    %c0_i32_1 = arith.constant 0 : i32
    return %arg0, %c0_i32, %c0_i32_0 : i32, i32, i32
  }
}

</mosaic_0001>

<llo_original>
// kernel: resize_conv2d_forward.1
$region0: #{resize_conv2d_forward.1}
  #allocation0 [shape = 'u32[]', space=smem, size = 0x4, offset = 0x4, fixed_abs, tag = 'smem constant byte address 0x4 - core index']
  #allocation1 [shape = 'u32[72,128]{1,0:T(1,128)}', space=vmem, size = 0x9000, scoped, tag = 'internal scratch']
  #allocation2 [shape = 'f32[24,384]{1,0:T(8,128)}', space=vmem, size = 0x9000, scoped, tag = 'scratch operand']
  %s0 = inlined_call_operand.vmem [shape: f32[32,24], index: 0, kind: input, shape index: {}]
  %s1 = inlined_call_operand.vmem [shape: f32[32,1], index: 1, kind: input, shape index: {}]
  %s2 = inlined_call_operand.vmem [shape: f32[2,5,324], index: 2, kind: input, shape index: {}]
  %s3 = inlined_call_operand.vmem [shape: f32[2,32,384], index: 3, kind: output, shape index: {}]
  %s4 = sld [smem:[#allocation0]]
  $region45: #{resize_conv2d_forward.1} parent=0
    _
  %s6 = ssub.s32 1, %s4
  %s7 = scalar_select 0, %s6, %s4
  loop: start=0, step=1, limit=4
  $region2: #{resize_conv2d_forward.1} parent=0 // loop_pre_header
    _
  $region3: #{resize_conv2d_forward.1} parent=0 // loop_header
    %s9 = sphi 0, %s13
    %p10 = scmp.ge.s32.totalorder %s9, 4
    %s17 = sphi 0, %s17
    %s19 = sphi 0, %s17
    %s20 = sphi 0, %s19
    %s34 = sphi 0, %s20
    %s38 = sphi 0, %s38
    %s40 = sphi 0, %s38
    %s41 = sphi 0, %s40
    %s55 = sphi 0, %s41
    %s61 = sphi 0, %s63
    %s64 = sphi 0, %s61
    %s65 = sphi 0, %s64
    %s81 = sphi 0, %s65
    %s87 = sphi 0, %s89
    %s90 = sphi 0, %s87
    %s91 = sphi 0, %s90
    %s107 = sphi 0, %s91
  $region4: #{resize_conv2d_forward.1} parent=0 // loop_header_branch
    %12 = sbr.rel (%p10) target = $region8
  $region5: #{resize_conv2d_forward.1} parent=0 // loop_body
    %s14 = ssub.s32 %s9, 1
    %s15 = ssub.s32 %s9, 2
    %s16 = sadd.s32 %s9, 1
    %s18 = sadd.s32 %s17, 1
    %p21 = scmp.eq.s32.totalorder %s9, 1
    %p22 = scmp.ne.s32.totalorder %s17, %s19
    %p23 = scmp.eq.s32.totalorder %s9, 0
    %p24 = por %p22, %p23
    %p25 = scmp.ne.s32.totalorder %s17, %s19
    %p26 = scmp.eq.s32.totalorder %s14, 1
    %p27 = por %p25, %p26
    %p28 = scmp.ne.s32.totalorder %s19, %s20
    %p29 = scmp.eq.s32.totalorder %s14, 0
    %p30 = por %p28, %p29
    %p31 = scmp.ne.s32.totalorder %s19, %s20
    %p32 = scmp.eq.s32.totalorder %s15, 1
    %p33 = por %p31, %p32
    %p35 = scmp.ne.s32.totalorder %s20, %s34
    %p36 = scmp.eq.s32.totalorder %s15, 0
    %p37 = por %p35, %p36
    %s39 = sadd.s32 %s38, 1
    %p42 = scmp.eq.s32.totalorder %s9, 1
    %p43 = scmp.ne.s32.totalorder %s38, %s40
    %p44 = scmp.eq.s32.totalorder %s9, 0
    %p45 = por %p43, %p44
    %p46 = scmp.ne.s32.totalorder %s38, %s40
    %p47 = scmp.eq.s32.totalorder %s14, 1
    %p48 = por %p46, %p47
    %p49 = scmp.ne.s32.totalorder %s40, %s41
    %p50 = scmp.eq.s32.totalorder %s14, 0
    %p51 = por %p49, %p50
    %p52 = scmp.ne.s32.totalorder %s40, %s41
    %p53 = scmp.eq.s32.totalorder %s15, 1
    %p54 = por %p52, %p53
    %p56 = scmp.ne.s32.totalorder %s41, %s55
    %p57 = scmp.eq.s32.totalorder %s15, 0
    %p58 = por %p56, %p57
    %s59 = ssub.s32 %s9, %s16
    %p60 = scmp.eq.s32.totalorder %s59, 0
    %s62 = sadd.s32 %s61, 1
    %s63 = scalar_select %p60, %s61, %s62
    %p66 = pneg %p60
    %p67 = scmp.eq.s32.totalorder %s9, 1
    %p68 = por %p66, %p67
    %p69 = scmp.ne.s32.totalorder %s61, %s64
    %p70 = scmp.eq.s32.totalorder %s9, 0
    %p71 = por %p69, %p70
    %p72 = scmp.ne.s32.totalorder %s61, %s64
    %p73 = scmp.eq.s32.totalorder %s14, 1
    %p74 = por %p72, %p73
    %p75 = scmp.ne.s32.totalorder %s64, %s65
    %p76 = scmp.eq.s32.totalorder %s14, 0
    %p77 = por %p75, %p76
    %p78 = scmp.ne.s32.totalorder %s64, %s65
    %p79 = scmp.eq.s32.totalorder %s15, 1
    %p80 = por %p78, %p79
    %p82 = scmp.ne.s32.totalorder %s65, %s81
    %p83 = scmp.eq.s32.totalorder %s15, 0
    %p84 = por %p82, %p83
    %s85 = ssub.s32 %s9, %s16
    %p86 = scmp.eq.s32.totalorder %s85, 0
    %s88 = sadd.s32 %s87, 1
    %s89 = scalar_select %p86, %s87, %s88
    %p92 = pneg %p86
    %p93 = scmp.eq.s32.totalorder %s9, 1
    %p94 = por %p92, %p93
    %p95 = scmp.ne.s32.totalorder %s87, %s90
    %p96 = scmp.eq.s32.totalorder %s9, 0
    %p97 = por %p95, %p96
    %p98 = scmp.ne.s32.totalorder %s87, %s90
    %p99 = scmp.eq.s32.totalorder %s14, 1
    %p100 = por %p98, %p99
    %p101 = scmp.ne.s32.totalorder %s90, %s91
    %p102 = scmp.eq.s32.totalorder %s14, 0
    %p103 = por %p101, %p102
    %p104 = scmp.ne.s32.totalorder %s90, %s91
    %p105 = scmp.eq.s32.totalorder %s15, 1
    %p106 = por %p104, %p105
    %p108 = scmp.ne.s32.totalorder %s91, %s107
    %p109 = scmp.eq.s32.totalorder %s15, 0
    %p110 = por %p108, %p109
    %p111 = scmp.le.s32.totalorder 1, %s9
    %p112 = scmp.lt.s32.totalorder %s9, 3
    %p113 = pnand %p111, %p112
    %p114 = pneg %p113
    // Predicated region
    $region9: #{resize_conv2d_forward.1} parent=5 // pred_check
      _
    $region10: #{resize_conv2d_forward.1} parent=5 // pred_check_branch
      %116 = sbr.rel (%p113) target = $region12
    $region11: #{resize_conv2d_forward.1} parent=5 // pred_region
      %s117 = ssub.s32 %s9, 1
      // Predicated region
      $region13: #{resize_conv2d_forward.1} parent=11 // pred_check
        %p118 = pneg %p30
      $region14: #{resize_conv2d_forward.1} parent=11 // pred_check_branch
        %120 = sbr.rel (%p118) target = $region16
      $region15: #{resize_conv2d_forward.1} parent=11 // pred_region
        _
      $region16: #{resize_conv2d_forward.1} parent=11 // pred_fallthru
        _
      // Predicated region
      $region17: #{resize_conv2d_forward.1} parent=11 // pred_check
        %p121 = pneg %p51
      $region18: #{resize_conv2d_forward.1} parent=11 // pred_check_branch
        %123 = sbr.rel (%p121) target = $region20
      $region19: #{resize_conv2d_forward.1} parent=11 // pred_region
        _
      $region20: #{resize_conv2d_forward.1} parent=11 // pred_fallthru
        _
    $region12: #{resize_conv2d_forward.1} parent=5 // pred_fallthru
      _
    %p124 = scmp.lt.s32.totalorder %s9, 2
    // Predicated region
    $region21: #{resize_conv2d_forward.1} parent=5 // pred_check
      %p125 = pneg %p124
    $region22: #{resize_conv2d_forward.1} parent=5 // pred_check_branch
      %127 = sbr.rel (%p125) target = $region24
    $region23: #{resize_conv2d_forward.1} parent=5 // pred_region
      // Predicated region
      $region25: #{resize_conv2d_forward.1} parent=23 // pred_check
        %p128 = pneg %p71
      $region26: #{resize_conv2d_forward.1} parent=23 // pred_check_branch
        %130 = sbr.rel (%p128) target = $region28
      $region27: #{resize_conv2d_forward.1} parent=23 // pred_region
        %p131 = scmp.lt.s32.totalorder %s9, 1
        %s132 = scalar_select %p131, %s9, 1
        %s133 = smul.addr %s132, 3
        %s134 = smul.addr %s133, 8
        %s135 = scalar_lea.vmem %s2, %s134
      $region28: #{resize_conv2d_forward.1} parent=23 // pred_fallthru
        _
    $region24: #{resize_conv2d_forward.1} parent=5 // pred_fallthru
      _
    %p136 = scmp.le.s32.totalorder 1, %s9
    %p137 = scmp.lt.s32.totalorder %s9, 3
    %p138 = pnand %p136, %p137
    %p139 = pneg %p138
    // Predicated region
    $region29: #{resize_conv2d_forward.1} parent=5 // pred_check
      _
    $region30: #{resize_conv2d_forward.1} parent=5 // pred_check_branch
      %141 = sbr.rel (%p138) target = $region32
    $region31: #{resize_conv2d_forward.1} parent=5 // pred_region
      %s142 = ssub.s32 %s9, 1
      %p143 = pneg %p30
      %p144 = pneg %p27
      %p145 = pneg %p51
      %p146 = pneg %p48
      %p147 = scmp.lt.s32.totalorder %s14, 1
      %s148 = scalar_select %p147, %s14, 1
      %s149 = smul.addr %s148, 3
      %s150 = smul.addr %s149, 8
      %s151 = scalar_lea.vmem %s2, %s150
      %p152 = pneg %p77
      %p153 = pneg %p74
      %p154 = pneg %p103
      %p155 = pneg %p100
      %p156 = scmp.lt.s32.totalorder %s14, 1
      %s157 = scalar_select %p156, %s14, 1
      %s158 = smul.addr %s157, 12
      %s159 = smul.addr %s158, 8
      %s160 = scalar_lea.vmem %s3, %s159
      %p161 = scmp.lt.s32.totalorder %s14, 1
      %s162 = scalar_select %p161, %s14, 1
      %s163 = smul.addr %s162, 3
      %s164 = smul.addr %s163, 8
      %s165 = scalar_lea.vmem %s2, %s164
      %p166 = scmp.lt.s32.totalorder %s14, 1
      %s167 = scalar_select %p166, %s14, 1
      %s168 = smul.addr %s167, 12
      %s169 = smul.addr %s168, 8
      %s170 = scalar_lea.vmem %s3, %s169
      %171 = vst [vmem:[#allocation2] sm:$0xff] 0.0
      %172 = vst [vmem:[#allocation2 + $0x8] sm:$0xff] 0.0
      %173 = vst [vmem:[#allocation2 + $0x10] sm:$0xff] 0.0
      %174 = vst [vmem:[#allocation2 + $0x18] sm:$0xff] 0.0
      %175 = vst [vmem:[#allocation2 + $0x20] sm:$0xff] 0.0
      %176 = vst [vmem:[#allocation2 + $0x28] sm:$0xff] 0.0
      %177 = vst [vmem:[#allocation2 + $0x30] sm:$0xff] 0.0
      %178 = vst [vmem:[#allocation2 + $0x38] sm:$0xff] 0.0
      %179 = vst [vmem:[#allocation2 + $0x40] sm:$0xff] 0.0
      %v180 = vld [vmem:[%s165] sm:$0x1f]
      %v181 = vld [vmem:[%s165 + $0x8] sm:$0x1f]
      %v182 = vld [vmem:[%s165 + $0x10] sm:$0x1f]
      %183 = vst [vmem:[#allocation2] sm:$0x1f] %v180
      %184 = vst [vmem:[#allocation2 + $0x8] sm:$0x1f] %v181
      %vm185 = vcmask 397312
      %186 = vst.msk [vmem:[#allocation2 + $0x10] sm:$0x1f] %vm185, %v182
      %v190 = vrot.slane %v180, 3
      %v191 = vrot.slane %v181, 3
      %v192 = vrot.slane %v182, 3
      %193 = vrot.lane.b32.xlu0 %v190, 127
      %v194 = vpop.permute.xlu0 %193
      %195 = vrot.lane.b32.xlu0 %v191, 127
      %v196 = vpop.permute.xlu0 %195
      %197 = vrot.lane.b32.xlu0 %v192, 127
      %v198 = vpop.permute.xlu0 %197
      %vm199 = vcmask 1039360
      %v200 = vsel %vm199, %v194, %v196
      %v201 = vsel %vm199, %v196, %v198
      %205 = vst [vmem:[#allocation2] sm:$0xe0] %v200
      %206 = vst [vmem:[#allocation2 + $0x8] sm:$0xe0] %v201
      %vm207 = vcmask 400389
      %208 = vst.msk [vmem:[#allocation2 + $0x10] sm:$0xe0] %vm207, %v198
      %209 = vst [vmem:[#allocation2 + $0x18] sm:$0x3] %v200
      %210 = vst [vmem:[#allocation2 + $0x20] sm:$0x3] %v201
      %vm211 = vcmask 394240
      %212 = vst.msk [vmem:[#allocation2 + $0x28] sm:$0x3] %vm211, %v198
      %v213 = vrot.slane %v180, 6
      %v214 = vrot.slane %v181, 6
      %v215 = vrot.slane %v182, 6
      %216 = vrot.lane.b32.xlu0 %v213, 110
      %v217 = vpop.permute.xlu0 %216
      %218 = vrot.lane.b32.xlu0 %v214, 110
      %v219 = vpop.permute.xlu0 %218
      %220 = vrot.lane.b32.xlu0 %v215, 110
      %v221 = vpop.permute.xlu0 %220
      %vm222 = vcmask 900096
      %v223 = vsel %vm222, %v217, %v219
      %v224 = vsel %vm222, %v219, %v221
      %228 = vst [vmem:[#allocation2 + $0x18] sm:$0x7c] %v223
      %229 = vst [vmem:[#allocation2 + $0x20] sm:$0x7c] %v224
      %vm230 = vcmask 399362
      %231 = vst.msk [vmem:[#allocation2 + $0x28] sm:$0x7c] %vm230, %v221
      %v232 = vrot.slane %v180, 1
      %v233 = vrot.slane %v181, 1
      %v234 = vrot.slane %v182, 1
      %235 = vrot.lane.b32.xlu0 %v232, 109
      %v236 = vpop.permute.xlu0 %235
      %237 = vrot.lane.b32.xlu0 %v233, 109
      %v238 = vpop.permute.xlu0 %237
      %239 = vrot.lane.b32.xlu0 %v234, 109
      %v240 = vpop.permute.xlu0 %239
      %vm241 = vcmask 891904
      %v242 = vsel %vm241, %v236, %v238
      %v243 = vsel %vm241, %v238, %v240
      %247 = vst [vmem:[#allocation2 + $0x18] sm:$0x80] %v242
      %248 = vst [vmem:[#allocation2 + $0x20] sm:$0x80] %v243
      %vm249 = vcmask 400391
      %250 = vst.msk [vmem:[#allocation2 + $0x28] sm:$0x80] %vm249, %v240
      %251 = vst [vmem:[#allocation2 + $0x30] sm:$0xf] %v242
      %252 = vst [vmem:[#allocation2 + $0x38] sm:$0xf] %v243
      %vm253 = vcmask 396288
      %254 = vst.msk [vmem:[#allocation2 + $0x40] sm:$0xf] %vm253, %v240
      %v255 = vld [vmem:[%s0] sm:$0xff]
      %v256 = vld [vmem:[%s0 + $0x8] sm:$0xff]
      %v257 = vld [vmem:[%s0 + $0x10] sm:$0xff]
      %v258 = vld [vmem:[%s0 + $0x18] sm:$0xff]
      %v259 = vld [vmem:[#allocation2] sm:$0xff]
      %v260 = vld [vmem:[#allocation2 + $0x8] sm:$0xff]
      %v261 = vld [vmem:[#allocation2 + $0x10] sm:$0xff]
      %v262 = vld [vmem:[#allocation2 + $0x18] sm:$0xff]
      %v263 = vld [vmem:[#allocation2 + $0x20] sm:$0xff]
      %v264 = vld [vmem:[#allocation2 + $0x28] sm:$0xff]
      %v265 = vld [vmem:[#allocation2 + $0x30] sm:$0xff]
      %v266 = vld [vmem:[#allocation2 + $0x38] sm:$0xff]
      %v267 = vld [vmem:[#allocation2 + $0x40] sm:$0xff]
      %v268 = vld [vmem:[%s1] sm:$0xff]
      %v269 = vld [vmem:[%s1 + $0x8] sm:$0xff]
      %v270 = vld [vmem:[%s1 + $0x10] sm:$0xff]
      %v271 = vld [vmem:[%s1 + $0x18] sm:$0xff]
      %273 = vset.pattern.permute.xlu0 0
      %274 = vperm.xlu0 %273, %v268
      %v275 = vpop.permute.xlu0 %274
      %278 = vset.pattern.permute.xlu0 0
      %279 = vperm.xlu0 %278, %v269
      %v280 = vpop.permute.xlu0 %279
      %283 = vset.pattern.permute.xlu0 0
      %284 = vperm.xlu0 %283, %v270
      %v285 = vpop.permute.xlu0 %284
      %288 = vset.pattern.permute.xlu0 0
      %289 = vperm.xlu0 %288, %v271
      %v290 = vpop.permute.xlu0 %289
      %vm292 = vcmask 195584
      %v294 = vsel %vm292, %v255, 0
      %v297 = vsel %vm292, %v256, 0
      %v300 = vsel %vm292, %v257, 0
      %v303 = vsel %vm292, %v258, 0
      %305 = vmatpush.msra.mxu0 0.0
      %306 = vmatpush.msra.mxu0 0.0
      %307 = vmatpush.msra.mxu0 0.0
      %308 = vmatpush.msra.mxu0 0.0
      %309 = vmatpush.msra.mxu0 0.0
      %310 = vmatpush.msra.mxu0 0.0
      %311 = vmatpush.msra.mxu0 0.0
      %312 = vmatpush.msra.mxu0 0.0
      %313 = vmatpush.msra.mxu0 0.0
      %314 = vmatpush.msra.mxu0 0.0
      %315 = vmatpush.msra.mxu0 0.0
      %316 = vmatpush.msra.mxu0 0.0
      %317 = vmatpush.msra.mxu0 0.0
      %318 = vmatpush.msra.mxu0 %v265
      %319 = vmatpush.msra.mxu0 %v262
      %320 = vmatpush.msra.mxu0 %v259
      %321 = vmatmul.f32.gmra.mxu0 %v294
      %v322 = vpop.f32.mrf.mxu0
      %v323 = vadd.f32 %v275, %v322
      %324 = vmatmul.f32.gmra.mxu0 %v297
      %v325 = vpop.f32.mrf.mxu0
      %v326 = vadd.f32 %v280, %v325
      %327 = vmatmul.f32.gmra.mxu0 %v300
      %v328 = vpop.f32.mrf.mxu0
      %v329 = vadd.f32 %v285, %v328
      %330 = vmatmul.f32.gmra.mxu0 %v303
      %v331 = vpop.f32.mrf.mxu0
      %v332 = vadd.f32 %v290, %v331
      %333 = vdwg.mxu0
      %334 = vmatpush.msra.mxu0 0.0
      %335 = vmatpush.msra.mxu0 0.0
      %336 = vmatpush.msra.mxu0 0.0
      %337 = vmatpush.msra.mxu0 0.0
      %338 = vmatpush.msra.mxu0 0.0
      %339 = vmatpush.msra.mxu0 0.0
      %340 = vmatpush.msra.mxu0 0.0
      %341 = vmatpush.msra.mxu0 0.0
      %342 = vmatpush.msra.mxu0 0.0
      %343 = vmatpush.msra.mxu0 0.0
      %344 = vmatpush.msra.mxu0 0.0
      %345 = vmatpush.msra.mxu0 0.0
      %346 = vmatpush.msra.mxu0 0.0
      %347 = vmatpush.msra.mxu0 %v266
      %348 = vmatpush.msra.mxu0 %v263
      %349 = vmatpush.msra.mxu0 %v260
      %350 = vmatmul.f32.gmra.mxu0 %v294
      %v351 = vpop.f32.mrf.mxu0
      %v352 = vadd.f32 %v275, %v351
      %353 = vmatmul.f32.gmra.mxu0 %v297
      %v354 = vpop.f32.mrf.mxu0
      %v355 = vadd.f32 %v280, %v354
      %356 = vmatmul.f32.gmra.mxu0 %v300
      %v357 = vpop.f32.mrf.mxu0
      %v358 = vadd.f32 %v285, %v357
      %359 = vmatmul.f32.gmra.mxu0 %v303
      %v360 = vpop.f32.mrf.mxu0
      %v361 = vadd.f32 %v290, %v360
      %362 = vdwg.mxu0
      %363 = vmatpush.msra.mxu0 0.0
      %364 = vmatpush.msra.mxu0 0.0
      %365 = vmatpush.msra.mxu0 0.0
      %366 = vmatpush.msra.mxu0 0.0
      %367 = vmatpush.msra.mxu0 0.0
      %368 = vmatpush.msra.mxu0 0.0
      %369 = vmatpush.msra.mxu0 0.0
      %370 = vmatpush.msra.mxu0 0.0
      %371 = vmatpush.msra.mxu0 0.0
      %372 = vmatpush.msra.mxu0 0.0
      %373 = vmatpush.msra.mxu0 0.0
      %374 = vmatpush.msra.mxu0 0.0
      %375 = vmatpush.msra.mxu0 0.0
      %376 = vmatpush.msra.mxu0 %v267
      %377 = vmatpush.msra.mxu0 %v264
      %378 = vmatpush.msra.mxu0 %v261
      %379 = vmatmul.f32.gmra.mxu0 %v294
      %v380 = vpop.f32.mrf.mxu0
      %v381 = vadd.f32 %v275, %v380
      %382 = vmatmul.f32.gmra.mxu0 %v297
      %v383 = vpop.f32.mrf.mxu0
      %v384 = vadd.f32 %v280, %v383
      %385 = vmatmul.f32.gmra.mxu0 %v300
      %v386 = vpop.f32.mrf.mxu0
      %v387 = vadd.f32 %v285, %v386
      %388 = vmatmul.f32.gmra.mxu0 %v303
      %v389 = vpop.f32.mrf.mxu0
      %v390 = vadd.f32 %v290, %v389
      %391 = vdwg.mxu0
      %392 = vst [vmem:[%s170] sm:$0xff] %v323
      %393 = vst [vmem:[%s170 + $0x8] sm:$0xff] %v352
      %394 = vst [vmem:[%s170 + $0x10] sm:$0xff] %v381
      %395 = vst [vmem:[%s170 + $0x18] sm:$0xff] %v326
      %396 = vst [vmem:[%s170 + $0x20] sm:$0xff] %v355
      %397 = vst [vmem:[%s170 + $0x28] sm:$0xff] %v384
      %398 = vst [vmem:[%s170 + $0x30] sm:$0xff] %v329
      %399 = vst [vmem:[%s170 + $0x38] sm:$0xff] %v358
      %400 = vst [vmem:[%s170 + $0x40] sm:$0xff] %v387
      %401 = vst [vmem:[%s170 + $0x48] sm:$0xff] %v332
      %402 = vst [vmem:[%s170 + $0x50] sm:$0xff] %v361
      %403 = vst [vmem:[%s170 + $0x58] sm:$0xff] %v390
      %p404 = scmp.lt.s32.totalorder %s14, 1
      %s405 = scalar_select %p404, %s14, 1
      %s406 = smul.addr %s405, 12
      %s407 = smul.addr %s406, 8
      %s408 = scalar_lea.vmem %s3, %s407
      // Predicated region
      $region33: #{resize_conv2d_forward.1} parent=31 // pred_check
        %p409 = pneg %p100
      $region34: #{resize_conv2d_forward.1} parent=31 // pred_check_branch
        %411 = sbr.rel (%p409) target = $region36
      $region35: #{resize_conv2d_forward.1} parent=31 // pred_region
        _
      $region36: #{resize_conv2d_forward.1} parent=31 // pred_fallthru
        _
    $region32: #{resize_conv2d_forward.1} parent=5 // pred_fallthru
      _
    %p412 = scmp.le.s32.totalorder 2, %s9
    // Predicated region
    $region37: #{resize_conv2d_forward.1} parent=5 // pred_check
      %p413 = pneg %p412
    $region38: #{resize_conv2d_forward.1} parent=5 // pred_check_branch
      %415 = sbr.rel (%p413) target = $region40
    $region39: #{resize_conv2d_forward.1} parent=5 // pred_region
      %s416 = ssub.s32 %s9, 2
      // Predicated region
      $region41: #{resize_conv2d_forward.1} parent=39 // pred_check
        %p417 = pneg %p106
      $region42: #{resize_conv2d_forward.1} parent=39 // pred_check_branch
        %419 = sbr.rel (%p417) target = $region44
      $region43: #{resize_conv2d_forward.1} parent=39 // pred_region
        %p420 = scmp.lt.s32.totalorder %s15, 1
        %s421 = scalar_select %p420, %s15, 1
        %s422 = smul.addr %s421, 12
        %s423 = smul.addr %s422, 8
        %s424 = scalar_lea.vmem %s3, %s423
      $region44: #{resize_conv2d_forward.1} parent=39 // pred_fallthru
        _
    $region40: #{resize_conv2d_forward.1} parent=5 // pred_fallthru
      _
  $region6: #{resize_conv2d_forward.1} parent=0 // loop_footer
    %s13 = sadd.s32 1, %s9
  $region7: #{resize_conv2d_forward.1} parent=0 // loop_footer_branch
    %8 = sbr.rel target = $region3
  $region8: #{resize_conv2d_forward.1} parent=0 // loop_exit
    _

</llo_original>
